<compile_context>
chip_gen: v7x
topology: tpu7x:2x2x1
jax: 0.10.0
libtpu: 0.0.40
codegen_flags: <defaults>
</compile_context>

<pallas_src>
import functools

import jax
import jax.numpy as jnp
from jax import lax
from jax.experimental import pallas as pl
from jax.experimental.pallas import tpu as pltpu

LANES = 128
SUBLANES = 8
SMOOTH_L1_BETA = 1.0          # beta == 1.0 -> the /beta folds away at trace time
MAX_BLOCK_BYTES = 2 << 20     # 2 MiB input tile per operand


def _tensorcores_per_chip() -> int:
    """Best-effort TensorCore count per chip; defaults to 1 (v5e/v6e)."""
    try:
        info = pltpu.get_tpu_info()
    except Exception:
        return 1
    for name in ("num_tensorcores", "tensorcore_count", "num_cores_per_chip",
                 "cores_per_chip", "num_cores"):
        v = getattr(info, name, None)
        if isinstance(v, int) and v >= 1:
            return v
    return 1


def _largest_divisor_leq(n: int, cap: int) -> int:
    for c in range(min(cap, n), 0, -1):
        if n % c == 0:
            return c
    return 1


def _criterion_sums(d):
    """Plain-jnp per-criterion sums for the tiny ragged tail."""
    d = d.astype(jnp.float32)
    ad = jnp.abs(d)
    dd = d * d
    sl1 = jnp.where(ad < SMOOTH_L1_BETA,
                    (0.5 / SMOOTH_L1_BETA) * dd,
                    ad - 0.5 * SMOOTH_L1_BETA)
    return jnp.stack([jnp.sum(dd), jnp.sum(ad), jnp.sum(sl1)])


def _joint_loss_kernel(pred_ref, true_ref, out_ref, *,
                       n_rows, blocks_per_split, block_rows, chunk_rows):
    """Accumulates per-criterion partial sums into out_ref (3, 8, 128) f32."""
    c = pl.program_id(0)               # TensorCore split (size 1 on 1-TC chips)
    i = pl.program_id(1)               # block within split (reduction axis)
    # Row-based int32 scalar math: safe up to 2**31 rows (~2.7e11 elements).
    rows_remaining = n_rows - (c * blocks_per_split + i) * block_rows
    num_chunks = block_rows // chunk_rows          # static python int
    unroll = min(4, num_chunks)

    @pl.when(i == 0)
    def _init():
        out_ref[...] = jnp.zeros_like(out_ref)

    def accum_chunk(k, row_ids):
        start = pl.multiple_of(k * chunk_rows, chunk_rows)
        p = pred_ref[pl.ds(start, chunk_rows), :].astype(jnp.float32)
        t = true_ref[pl.ds(start, chunk_rows), :].astype(jnp.float32)
        d = p - t
        if row_ids is not None:
            # Zero rows past the end of the real data.  This also fully masks a
            # clamped duplicate block (rows_remaining <= 0) produced by the
            # index_map clamp in the wrapper -- the two are coupled by design.
            d = jnp.where(row_ids < rows_remaining - start, d, 0.0)
        ad = jnp.abs(d)
        dd = d * d
        sl1 = jnp.where(ad < SMOOTH_L1_BETA,
                        (0.5 / SMOOTH_L1_BETA) * dd,
                        ad - 0.5 * SMOOTH_L1_BETA)

        def red(x):   # (chunk_rows, 128) -> (8, 128): pure VPU vreg adds
            return jnp.sum(x.reshape(chunk_rows // SUBLANES, SUBLANES, LANES), axis=0)

        out_ref[0] += red(dd)     # MSE partial sums
        out_ref[1] += red(ad)     # L1 partial sums
        out_ref[2] += red(sl1)    # SmoothL1 partial sums

    @pl.when(rows_remaining >= block_rows)         # full interior block
    def _full():
        def body(k, carry):
            accum_chunk(k, None)
            return carry
        lax.fori_loop(0, num_chunks, body, 0, unroll=unroll)

    @pl.when(rows_remaining < block_rows)          # tail / clamped block
    def _tail():
        # Hoist the iota out of the loop (broadcast_in_dim is not CSE'd).
        row_ids = lax.broadcasted_iota(jnp.int32, (chunk_rows, LANES), 0)

        def body(k, carry):
            accum_chunk(k, row_ids)
            return carry
        lax.fori_loop(0, num_chunks, body, 0, unroll=unroll)


def joint_loss(y_pred, y_true, loss_weights):
    """total = sum_k w_k * mean(criterion_k(y_pred, y_true)); MSE/L1/SmoothL1."""
    assert y_pred.shape == y_true.shape
    n_elems = int(y_pred.size)
    itemsize = jnp.dtype(y_pred.dtype).itemsize
    # Sublane packing: 8 rows (f32), 16 (bf16/f16), 32 (int8/fp8).
    sub = SUBLANES * max(1, 4 // itemsize)
    pad_mult = sub * LANES

    flat_p = y_pred.reshape(-1)
    flat_t = y_true.reshape(-1)
    aligned = (n_elems // pad_mult) * pad_mult     # kernel-covered prefix

    sums = jnp.zeros((3,), jnp.float32)

    if aligned > 0:
        rows = aligned // LANES
        # Zero-copy reshape when the input is already aligned (common case);
        # otherwise only the aligned prefix is materialised (no pad + re-read).
        pfx_p = flat_p if aligned == n_elems else flat_p[:aligned]
        pfx_t = flat_t if aligned == n_elems else flat_t[:aligned]
        pred2d = pfx_p.reshape(rows, LANES)
        true2d = pfx_t.reshape(rows, LANES)

        max_block_rows = max(sub, (MAX_BLOCK_BYTES // (LANES * itemsize)) // sub * sub)
        block_rows = min(max_block_rows, rows)                 # multiple of sub
        chunk_rows = sub * _largest_divisor_leq(block_rows // sub, 32)
        total_blocks = -(-rows // block_rows)

        # Shard the reduction across TensorCores only when the chip has >1 TC
        # (v7x); on v5e/v6e a split is pure overhead for a mem-bound kernel.
        num_cores = _tensorcores_per_chip()
        num_splits = 2 if (num_cores >= 2 and total_blocks >= 2) else 1
        blocks_per_split = -(-total_blocks // num_splits)
        # Invariant the kernel relies on: any grid step whose logical block
        # index exceeds total_blocks-1 gets CLAMPED by in_map below; such a
        # step always sees rows_remaining <= 0 and masks its contribution to 0.
        assert num_splits * blocks_per_split >= total_blocks

        def in_map(c, i):
            return (jnp.minimum(c * blocks_per_split + i, total_blocks - 1), 0)

        kernel = functools.partial(
            _joint_loss_kernel, n_rows=rows, blocks_per_split=blocks_per_split,
            block_rows=block_rows, chunk_rows=chunk_rows)

        if num_splits > 1:
            lead = getattr(pltpu, "CORE_PARALLEL", None)
            if lead is None:
                lead = pltpu.PARALLEL
        else:
            lead = pltpu.ARBITRARY

        out_bytes = num_splits * 3 * SUBLANES * LANES * 4
        cost = pl.CostEstimate(
            flops=10 * aligned,
            transcendentals=0,
            bytes_accessed=2 * aligned * itemsize + out_bytes)

        partials = pl.pallas_call(
            kernel,
            out_shape=jax.ShapeDtypeStruct(
                (num_splits, 3, SUBLANES, LANES), jnp.float32),
            grid_spec=pltpu.PrefetchScalarGridSpec(
                num_scalar_prefetch=0,
                grid=(num_splits, blocks_per_split),
                in_specs=[
                    pl.BlockSpec((block_rows, LANES), in_map),
                    pl.BlockSpec((block_rows, LANES), in_map),
                ],
                out_specs=pl.BlockSpec((None, 3, SUBLANES, LANES),
                                       lambda c, i: (c, 0, 0, 0)),
            ),
            compiler_params=pltpu.CompilerParams(
                dimension_semantics=(lead, pltpu.ARBITRARY),
                vmem_limit_bytes=32 * 1024 * 1024),
            cost_estimate=cost,
        )(pred2d, true2d)

        # Tiny final reduce: 1024 f32 lane-accumulators per split; for huge
        # inputs (>=1e9 elems) each lane still only sums n/1024 terms.
        sums = jnp.sum(partials, axis=(0, 2, 3))               # (3,)

    if aligned < n_elems:
        # Ragged tail (< sub*128 elements): plain jnp, negligible HBM traffic.
        tp = flat_p[aligned:]
        tt = flat_t[aligned:]
        sums = sums + _criterion_sums(tp.astype(jnp.float32) - tt.astype(jnp.float32))

    w = loss_weights.astype(jnp.float32)
    # mean_k = sum_k / n for every criterion.
    return jnp.dot(w, sums) / jnp.float32(n_elems)


def _joint_loss_ref(y_pred, y_true, loss_weights):
    p = y_pred.astype(jnp.float32)
    t = y_true.astype(jnp.float32)
    d = p - t
    ad = jnp.abs(d)
    mse = jnp.mean(d * d)
    l1 = jnp.mean(ad)
    sl1 = jnp.mean(jnp.where(ad < SMOOTH_L1_BETA,
                             0.5 * d * d / SMOOTH_L1_BETA,
                             ad - 0.5 * SMOOTH_L1_BETA))
    w = loss_weights.astype(jnp.float32)
    return w[0] * mse + w[1] * l1 + w[2] * sl1


if __name__ == "__main__":
    key = jax.random.PRNGKey(0)
    k1, k2 = jax.random.split(key)
    # Small NCHW shapes consistent with a typical segmentation-style loss.
    y_pred = jax.random.normal(k1, (2, 4, 16, 16), dtype=jnp.float32)
    y_true = jax.random.normal(k2, (2, 4, 16, 16), dtype=jnp.float32)

    # register_buffer('loss_weights', tensor(loss_weight)) -> deterministic const.
    loss_weights = jnp.array([1.0, 0.5, 0.25], dtype=jnp.float32)

    result = joint_loss(y_pred, y_true, loss_weights)
    jax.block_until_ready(result)
    expected = _joint_loss_ref(y_pred, y_true, loss_weights)
    assert jnp.allclose(result, expected, rtol=1e-4, atol=1e-5), (result, expected)

    # Ragged, multi-chunk input: exercises the jnp tail path, the partial
    # final-block mask, and the fori_loop chunking.
    k3, k4 = jax.random.split(k2)
    yp2 = jax.random.normal(k3, (2, 5, 160, 173), dtype=jnp.float32)
    yt2 = jax.random.normal(k4, (2, 5, 160, 173), dtype=jnp.float32)
    r2 = joint_loss(yp2, yt2, loss_weights)
    jax.block_until_ready(r2)
    e2 = _joint_loss_ref(yp2, yt2, loss_weights)
    assert jnp.allclose(r2, e2, rtol=1e-4, atol=1e-5), (r2, e2)

    print("KERNEL_OK")
</pallas_src>

<mosaic_0001>
module attributes {stable_mosaic.version = 11 : i64} {
  func.func @_joint_loss_kernel(%arg0: i32, %arg1: i32, %arg2: memref<16x128xf32, #tpu.memory_space<vmem>>, %arg3: memref<16x128xf32, #tpu.memory_space<vmem>>, %arg4: memref<1x3x8x128xf32, #tpu.memory_space<vmem>>) attributes {dimension_semantics = [#tpu.dimension_semantics<arbitrary>, #tpu.dimension_semantics<arbitrary>], iteration_bounds = array<i64: 1, 1>, scalar_prefetch = 0 : i64, scratch_operands = 0 : i64, tpu.core_type = #tpu.core_type<tc>, window_params = [{transform_indices = @transform_0, window_bounds = array<i64: 16, 128>}, {transform_indices = @transform_1, window_bounds = array<i64: 16, 128>}, {transform_indices = @transform_2, window_bounds = array<i64: 1, 3, 8, 128>}]} {
    %c1_i32 = arith.constant 1 : i32
    %0 = arith.muli %arg0, %c1_i32 : i32
    %1 = arith.addi %0, %arg1 : i32
    %c16_i32 = arith.constant 16 : i32
    %2 = arith.muli %1, %c16_i32 : i32
    %c16_i32_0 = arith.constant 16 : i32
    %3 = arith.subi %c16_i32_0, %2 : i32
    %c0_i32 = arith.constant 0 : i32
    %4 = arith.cmpi eq, %arg1, %c0_i32 : i32
    %5 = arith.extui %4 : i1 to i32
    %c0_i32_1 = arith.constant 0 : i32
    %6 = arith.cmpi ne, %5, %c0_i32_1 : i32
    scf.if %6 {
      %cst = arith.constant 0.000000e+00 : f32
      %13 = vector.broadcast %cst : f32 to vector<3x8x128xf32>
      %c0 = arith.constant 0 : index
      %c0_6 = arith.constant 0 : index
      %c0_7 = arith.constant 0 : index
      %c0_8 = arith.constant 0 : index
      %14 = vector.load %arg4[%c0, %c0_6, %c0_7, %c0_8] : memref<1x3x8x128xf32, #tpu.memory_space<vmem>>, vector<1x3x8x128xf32>
      %15 = vector.shape_cast %14 : vector<1x3x8x128xf32> to vector<3x8x128xf32>
      %16 = vector.shape_cast %13 : vector<3x8x128xf32> to vector<1x3x8x128xf32>
      tpu.vector_store %arg4[%c0, %c0_6, %c0_7, %c0_8], %16 {strides = array<i32>} : memref<1x3x8x128xf32, #tpu.memory_space<vmem>>, vector<1x3x8x128xf32>,
    } else {
    }
    %c16_i32_2 = arith.constant 16 : i32
    %7 = arith.cmpi sge, %3, %c16_i32_2 : i32
    %8 = arith.extui %7 : i1 to i32
    %c0_i32_3 = arith.constant 0 : i32
    %9 = arith.cmpi ne, %8, %c0_i32_3 : i32
    scf.if %9 {
      %c0_i32_6 = arith.constant 0 : i32
      %c16_i32_7 = arith.constant 16 : i32
      %13 = arith.muli %c0_i32_6, %c16_i32_7 : i32
      %14 = tpu.assume_multiple %13, 16 : i32
      %15 = arith.index_cast %14 : i32 to index
      %c0 = arith.constant 0 : index
      %16 = vector.load %arg2[%15, %c0] : memref<16x128xf32, #tpu.memory_space<vmem>>, vector<16x128xf32>
      %17 = arith.index_cast %14 : i32 to index
      %c0_8 = arith.constant 0 : index
      %18 = vector.load %arg3[%17, %c0_8] : memref<16x128xf32, #tpu.memory_space<vmem>>, vector<16x128xf32>
      %19 = arith.subf %16, %18 : vector<16x128xf32>
      %20 = math.absf %19 : vector<16x128xf32>
      %21 = arith.mulf %19, %19 : vector<16x128xf32>
      %cst = arith.constant 1.000000e+00 : f32
      %22 = vector.broadcast %cst : f32 to vector<16x128xf32>
      %23 = arith.cmpf olt, %20, %22 : vector<16x128xf32>
      %cst_9 = arith.constant 5.000000e-01 : f32
      %24 = vector.broadcast %cst_9 : f32 to vector<16x128xf32>
      %25 = arith.mulf %24, %21 : vector<16x128xf32>
      %cst_10 = arith.constant 5.000000e-01 : f32
      %26 = vector.broadcast %cst_10 : f32 to vector<16x128xf32>
      %27 = arith.subf %20, %26 : vector<16x128xf32>
      %28 = arith.select %23, %25, %27 : vector<16x128xi1>, vector<16x128xf32>
      %c0_11 = arith.constant 0 : index
      %c0_12 = arith.constant 0 : index
      %c0_13 = arith.constant 0 : index
      %c0_14 = arith.constant 0 : index
      %29 = vector.load %arg4[%c0_11, %c0_12, %c0_13, %c0_14] : memref<1x3x8x128xf32, #tpu.memory_space<vmem>>, vector<1x1x8x128xf32>
      %30 = vector.shape_cast %29 : vector<1x1x8x128xf32> to vector<8x128xf32>
      %31 = vector.shape_cast %21 : vector<16x128xf32> to vector<2x8x128xf32>
      %cst_15 = arith.constant dense<0.000000e+00> : vector<8x128xf32>
      %32 = vector.multi_reduction <add>, %31, %cst_15 [0] : vector<2x8x128xf32> to vector<8x128xf32>
      %33 = arith.addf %30, %32 : vector<8x128xf32>
      %c0_16 = arith.constant 0 : index
      %c0_17 = arith.constant 0 : index
      %c0_18 = arith.constant 0 : index
      %c0_19 = arith.constant 0 : index
      %34 = vector.load %arg4[%c0_16, %c0_17, %c0_18, %c0_19] : memref<1x3x8x128xf32, #tpu.memory_space<vmem>>, vector<1x1x8x128xf32>
      %35 = vector.shape_cast %34 : vector<1x1x8x128xf32> to vector<8x128xf32>
      %36 = vector.shape_cast %33 : vector<8x128xf32> to vector<1x1x8x128xf32>
      tpu.vector_store %arg4[%c0_16, %c0_17, %c0_18, %c0_19], %36 {strides = array<i32>} : memref<1x3x8x128xf32, #tpu.memory_space<vmem>>, vector<1x1x8x128xf32>,
      %c0_20 = arith.constant 0 : index
      %c1 = arith.constant 1 : index
      %c0_21 = arith.constant 0 : index
      %c0_22 = arith.constant 0 : index
      %37 = vector.load %arg4[%c0_20, %c1, %c0_21, %c0_22] : memref<1x3x8x128xf32, #tpu.memory_space<vmem>>, vector<1x1x8x128xf32>
      %38 = vector.shape_cast %37 : vector<1x1x8x128xf32> to vector<8x128xf32>
      %39 = vector.shape_cast %20 : vector<16x128xf32> to vector<2x8x128xf32>
      %cst_23 = arith.constant dense<0.000000e+00> : vector<8x128xf32>
      %40 = vector.multi_reduction <add>, %39, %cst_23 [0] : vector<2x8x128xf32> to vector<8x128xf32>
      %41 = arith.addf %38, %40 : vector<8x128xf32>
      %c0_24 = arith.constant 0 : index
      %c1_25 = arith.constant 1 : index
      %c0_26 = arith.constant 0 : index
      %c0_27 = arith.constant 0 : index
      %42 = vector.load %arg4[%c0_24, %c1_25, %c0_26, %c0_27] : memref<1x3x8x128xf32, #tpu.memory_space<vmem>>, vector<1x1x8x128xf32>
      %43 = vector.shape_cast %42 : vector<1x1x8x128xf32> to vector<8x128xf32>
      %44 = vector.shape_cast %41 : vector<8x128xf32> to vector<1x1x8x128xf32>
      tpu.vector_store %arg4[%c0_24, %c1_25, %c0_26, %c0_27], %44 {strides = array<i32>} : memref<1x3x8x128xf32, #tpu.memory_space<vmem>>, vector<1x1x8x128xf32>,
      %c0_28 = arith.constant 0 : index
      %c2 = arith.constant 2 : index
      %c0_29 = arith.constant 0 : index
      %c0_30 = arith.constant 0 : index
      %45 = vector.load %arg4[%c0_28, %c2, %c0_29, %c0_30] : memref<1x3x8x128xf32, #tpu.memory_space<vmem>>, vector<1x1x8x128xf32>
      %46 = vector.shape_cast %45 : vector<1x1x8x128xf32> to vector<8x128xf32>
      %47 = vector.shape_cast %28 : vector<16x128xf32> to vector<2x8x128xf32>
      %cst_31 = arith.constant dense<0.000000e+00> : vector<8x128xf32>
      %48 = vector.multi_reduction <add>, %47, %cst_31 [0] : vector<2x8x128xf32> to vector<8x128xf32>
      %49 = arith.addf %46, %48 : vector<8x128xf32>
      %c0_32 = arith.constant 0 : index
      %c2_33 = arith.constant 2 : index
      %c0_34 = arith.constant 0 : index
      %c0_35 = arith.constant 0 : index
      %50 = vector.load %arg4[%c0_32, %c2_33, %c0_34, %c0_35] : memref<1x3x8x128xf32, #tpu.memory_space<vmem>>, vector<1x1x8x128xf32>
      %51 = vector.shape_cast %50 : vector<1x1x8x128xf32> to vector<8x128xf32>
      %52 = vector.shape_cast %49 : vector<8x128xf32> to vector<1x1x8x128xf32>
      tpu.vector_store %arg4[%c0_32, %c2_33, %c0_34, %c0_35], %52 {strides = array<i32>} : memref<1x3x8x128xf32, #tpu.memory_space<vmem>>, vector<1x1x8x128xf32>,
      %c1_i32_36 = arith.constant 1 : i32
    } else {
    }
    %c16_i32_4 = arith.constant 16 : i32
    %10 = arith.cmpi slt, %3, %c16_i32_4 : i32
    %11 = arith.extui %10 : i1 to i32
    %c0_i32_5 = arith.constant 0 : i32
    %12 = arith.cmpi ne, %11, %c0_i32_5 : i32
    scf.if %12 {
      %13 = tpu.iota {dimensions = array<i32: 0>} : vector<16x128xi32>
      %c0_i32_6 = arith.constant 0 : i32
      %c16_i32_7 = arith.constant 16 : i32
      %14 = arith.muli %c0_i32_6, %c16_i32_7 : i32
      %15 = tpu.assume_multiple %14, 16 : i32
      %16 = arith.index_cast %15 : i32 to index
      %c0 = arith.constant 0 : index
      %17 = vector.load %arg2[%16, %c0] : memref<16x128xf32, #tpu.memory_space<vmem>>, vector<16x128xf32>
      %18 = arith.index_cast %15 : i32 to index
      %c0_8 = arith.constant 0 : index
      %19 = vector.load %arg3[%18, %c0_8] : memref<16x128xf32, #tpu.memory_space<vmem>>, vector<16x128xf32>
      %20 = arith.subf %17, %19 : vector<16x128xf32>
      %21 = arith.subi %3, %15 : i32
      %22 = vector.broadcast %21 : i32 to vector<16x128xi32>
      %23 = arith.cmpi slt, %13, %22 : vector<16x128xi32>
      %cst = arith.constant 0.000000e+00 : f32
      %24 = vector.broadcast %cst : f32 to vector<16x128xf32>
      %25 = arith.select %23, %20, %24 : vector<16x128xi1>, vector<16x128xf32>
      %26 = math.absf %25 : vector<16x128xf32>
      %27 = arith.mulf %25, %25 : vector<16x128xf32>
      %cst_9 = arith.constant 1.000000e+00 : f32
      %28 = vector.broadcast %cst_9 : f32 to vector<16x128xf32>
      %29 = arith.cmpf olt, %26, %28 : vector<16x128xf32>
      %cst_10 = arith.constant 5.000000e-01 : f32
      %30 = vector.broadcast %cst_10 : f32 to vector<16x128xf32>
      %31 = arith.mulf %30, %27 : vector<16x128xf32>
      %cst_11 = arith.constant 5.000000e-01 : f32
      %32 = vector.broadcast %cst_11 : f32 to vector<16x128xf32>
      %33 = arith.subf %26, %32 : vector<16x128xf32>
      %34 = arith.select %29, %31, %33 : vector<16x128xi1>, vector<16x128xf32>
      %c0_12 = arith.constant 0 : index
      %c0_13 = arith.constant 0 : index
      %c0_14 = arith.constant 0 : index
      %c0_15 = arith.constant 0 : index
      %35 = vector.load %arg4[%c0_12, %c0_13, %c0_14, %c0_15] : memref<1x3x8x128xf32, #tpu.memory_space<vmem>>, vector<1x1x8x128xf32>
      %36 = vector.shape_cast %35 : vector<1x1x8x128xf32> to vector<8x128xf32>
      %37 = vector.shape_cast %27 : vector<16x128xf32> to vector<2x8x128xf32>
      %cst_16 = arith.constant dense<0.000000e+00> : vector<8x128xf32>
      %38 = vector.multi_reduction <add>, %37, %cst_16 [0] : vector<2x8x128xf32> to vector<8x128xf32>
      %39 = arith.addf %36, %38 : vector<8x128xf32>
      %c0_17 = arith.constant 0 : index
      %c0_18 = arith.constant 0 : index
      %c0_19 = arith.constant 0 : index
      %c0_20 = arith.constant 0 : index
      %40 = vector.load %arg4[%c0_17, %c0_18, %c0_19, %c0_20] : memref<1x3x8x128xf32, #tpu.memory_space<vmem>>, vector<1x1x8x128xf32>
      %41 = vector.shape_cast %40 : vector<1x1x8x128xf32> to vector<8x128xf32>
      %42 = vector.shape_cast %39 : vector<8x128xf32> to vector<1x1x8x128xf32>
      tpu.vector_store %arg4[%c0_17, %c0_18, %c0_19, %c0_20], %42 {strides = array<i32>} : memref<1x3x8x128xf32, #tpu.memory_space<vmem>>, vector<1x1x8x128xf32>,
      %c0_21 = arith.constant 0 : index
      %c1 = arith.constant 1 : index
      %c0_22 = arith.constant 0 : index
      %c0_23 = arith.constant 0 : index
      %43 = vector.load %arg4[%c0_21, %c1, %c0_22, %c0_23] : memref<1x3x8x128xf32, #tpu.memory_space<vmem>>, vector<1x1x8x128xf32>
      %44 = vector.shape_cast %43 : vector<1x1x8x128xf32> to vector<8x128xf32>
      %45 = vector.shape_cast %26 : vector<16x128xf32> to vector<2x8x128xf32>
      %cst_24 = arith.constant dense<0.000000e+00> : vector<8x128xf32>
      %46 = vector.multi_reduction <add>, %45, %cst_24 [0] : vector<2x8x128xf32> to vector<8x128xf32>
      %47 = arith.addf %44, %46 : vector<8x128xf32>
      %c0_25 = arith.constant 0 : index
      %c1_26 = arith.constant 1 : index
      %c0_27 = arith.constant 0 : index
      %c0_28 = arith.constant 0 : index
      %48 = vector.load %arg4[%c0_25, %c1_26, %c0_27, %c0_28] : memref<1x3x8x128xf32, #tpu.memory_space<vmem>>, vector<1x1x8x128xf32>
      %49 = vector.shape_cast %48 : vector<1x1x8x128xf32> to vector<8x128xf32>
      %50 = vector.shape_cast %47 : vector<8x128xf32> to vector<1x1x8x128xf32>
      tpu.vector_store %arg4[%c0_25, %c1_26, %c0_27, %c0_28], %50 {strides = array<i32>} : memref<1x3x8x128xf32, #tpu.memory_space<vmem>>, vector<1x1x8x128xf32>,
      %c0_29 = arith.constant 0 : index
      %c2 = arith.constant 2 : index
      %c0_30 = arith.constant 0 : index
      %c0_31 = arith.constant 0 : index
      %51 = vector.load %arg4[%c0_29, %c2, %c0_30, %c0_31] : memref<1x3x8x128xf32, #tpu.memory_space<vmem>>, vector<1x1x8x128xf32>
      %52 = vector.shape_cast %51 : vector<1x1x8x128xf32> to vector<8x128xf32>
      %53 = vector.shape_cast %34 : vector<16x128xf32> to vector<2x8x128xf32>
      %cst_32 = arith.constant dense<0.000000e+00> : vector<8x128xf32>
      %54 = vector.multi_reduction <add>, %53, %cst_32 [0] : vector<2x8x128xf32> to vector<8x128xf32>
      %55 = arith.addf %52, %54 : vector<8x128xf32>
      %c0_33 = arith.constant 0 : index
      %c2_34 = arith.constant 2 : index
      %c0_35 = arith.constant 0 : index
      %c0_36 = arith.constant 0 : index
      %56 = vector.load %arg4[%c0_33, %c2_34, %c0_35, %c0_36] : memref<1x3x8x128xf32, #tpu.memory_space<vmem>>, vector<1x1x8x128xf32>
      %57 = vector.shape_cast %56 : vector<1x1x8x128xf32> to vector<8x128xf32>
      %58 = vector.shape_cast %55 : vector<8x128xf32> to vector<1x1x8x128xf32>
      tpu.vector_store %arg4[%c0_33, %c2_34, %c0_35, %c0_36], %58 {strides = array<i32>} : memref<1x3x8x128xf32, #tpu.memory_space<vmem>>, vector<1x1x8x128xf32>,
      %c1_i32_37 = arith.constant 1 : i32
    } else {
    }
    return
  }
  func.func @transform_0(%arg0: i32, %arg1: i32) -> (i32, i32) {
    %c1_i32 = arith.constant 1 : i32
    %0 = arith.muli %arg0, %c1_i32 : i32
    %1 = arith.addi %0, %arg1 : i32
    %c0_i32 = arith.constant 0 : i32
    %2 = arith.minsi %1, %c0_i32 : i32
    %c0_i32_0 = arith.constant 0 : i32
    %c0_i32_1 = arith.constant 0 : i32
    return %2, %c0_i32_0 : i32, i32
  }
  func.func @transform_1(%arg0: i32, %arg1: i32) -> (i32, i32) {
    %c1_i32 = arith.constant 1 : i32
    %0 = arith.muli %arg0, %c1_i32 : i32
    %1 = arith.addi %0, %arg1 : i32
    %c0_i32 = arith.constant 0 : i32
    %2 = arith.minsi %1, %c0_i32 : i32
    %c0_i32_0 = arith.constant 0 : i32
    %c0_i32_1 = arith.constant 0 : i32
    return %2, %c0_i32_0 : i32, i32
  }
  func.func @transform_2(%arg0: i32, %arg1: i32) -> (i32, i32, i32, i32) {
    %c0_i32 = arith.constant 0 : i32
    %c0_i32_0 = arith.constant 0 : i32
    %c0_i32_1 = arith.constant 0 : i32
    %c0_i32_2 = arith.constant 0 : i32
    return %arg0, %c0_i32, %c0_i32_0, %c0_i32_1 : i32, i32, i32, i32
  }
}

</mosaic_0001>

<llo_original>
// kernel: tpu_custom_call.1
$region0: #{tpu_custom_call.1}
  #allocation0 [shape = 'u32[]', space=smem, size = 0x4, offset = 0x4, fixed_abs, tag = 'smem constant byte address 0x4 - core index']
  #allocation1 [shape = 'u32[144,128]{1,0:T(1,128)}', space=vmem, size = 0x12000, scoped, tag = 'internal scratch']
  %s0 = inlined_call_operand.hbm [shape: f32[16,128], index: 0, kind: input, shape index: {}]
  %s1 = inlined_call_operand.hbm [shape: f32[16,128], index: 1, kind: input, shape index: {}]
  %s2 = inlined_call_operand.hbm [shape: f32[1,3,8,128], index: 2, kind: output, shape index: {}]
  %s3 = sld [smem:[#allocation0]]
  $region38: #{tpu_custom_call.1} parent=0
    _
  %s5 = ssub.s32 1, %s3
  %s6 = scalar_select 0, %s5, %s3
  $region1: #{tpu_custom_call.1} parent=0
    #allocation2 [shape = 'u8[8192]{0}', space=vmem, size = 0x2000, scoped, tag = 'input window, operand 0, single buffered']
    #allocation3 [shape = 's32[1]{0}', space=sflag, size = 0x4, scoped, tag = 'scoped memory for tpu_custom_call.1']
    #allocation4 [shape = 's32[1]{0}', space=sflag, size = 0x4, scoped, tag = 'scoped memory for tpu_custom_call.1']
    #allocation5 [shape = 'u8[8192]{0}', space=vmem, size = 0x2000, scoped, tag = 'input window, operand 1, single buffered']
    #allocation6 [shape = 's32[1]{0}', space=sflag, size = 0x4, scoped, tag = 'scoped memory for tpu_custom_call.1']
    #allocation7 [shape = 'u8[12288]{0}', space=vmem, size = 0x3000, scoped, tag = 'output window, operand 0, single buffered']
    %7 = vsyncpa [#allocation3], 0
    %8 = vsyncpa [#allocation6], 0
    %9 = vsyncpa [#allocation4], 0
    // Predicated region
    $region2: #{tpu_custom_call.1} parent=1 // pred_check
      _
    $region3: #{tpu_custom_call.1} parent=1 // pred_check_branch
      %11 = sbr.rel (0) target = $region5
    $region4: #{tpu_custom_call.1} parent=1 // pred_region
      %s12 = sadd.s32 0, 0
      %p13 = scmp.lt.s32.totalorder %s12, 0
      %s14 = scalar_select %p13, %s12, 0
      %s15 = smul.u32 2, %s14
      %s17 = ssub.s32 256, 256
      %18 = vsyncadd [#allocation3], %s17
      %s19 = smul.addr %s15, 128
      %s20 = scalar_lea.hbm %s0, %s19
      %s21 = sshll.u32 [#allocation2], 4
      %s22 = int_to_ptr.vmem [resolvable:$true] %s21
      %27 = dma.hbm_to_vmem [thread:$0]  %s20, 256, %s22, [#allocation3], 128, 128, 8
    $region5: #{tpu_custom_call.1} parent=1 // pred_fallthru
      _
    // Predicated region
    $region6: #{tpu_custom_call.1} parent=1 // pred_check
      _
    $region7: #{tpu_custom_call.1} parent=1 // pred_check_branch
      %29 = sbr.rel (0) target = $region9
    $region8: #{tpu_custom_call.1} parent=1 // pred_region
      %s30 = sadd.s32 0, 0
      %p31 = scmp.lt.s32.totalorder %s30, 0
      %s32 = scalar_select %p31, %s30, 0
      %s33 = smul.u32 2, %s32
      %s35 = ssub.s32 256, 256
      %36 = vsyncadd [#allocation6], %s35
      %s37 = smul.addr %s33, 128
      %s38 = scalar_lea.hbm %s1, %s37
      %s39 = sshll.u32 [#allocation5], 4
      %s40 = int_to_ptr.vmem [resolvable:$true] %s39
      %45 = dma.hbm_to_vmem [thread:$0]  %s38, 256, %s40, [#allocation6], 128, 128, 8
    $region9: #{tpu_custom_call.1} parent=1 // pred_fallthru
      _
    // Predicated region
    $region10: #{tpu_custom_call.1} parent=1 // pred_check
      _
    $region11: #{tpu_custom_call.1} parent=1 // pred_check_branch
      %47 = sbr.rel (0) target = $region13
    $region12: #{tpu_custom_call.1} parent=1 // pred_region
      %48 = dma.done [#allocation3], 256
    $region13: #{tpu_custom_call.1} parent=1 // pred_fallthru
      _
    // Predicated region
    $region14: #{tpu_custom_call.1} parent=1 // pred_check
      _
    $region15: #{tpu_custom_call.1} parent=1 // pred_check_branch
      %50 = sbr.rel (0) target = $region17
    $region16: #{tpu_custom_call.1} parent=1 // pred_region
      %51 = dma.done [#allocation6], 256
    $region17: #{tpu_custom_call.1} parent=1 // pred_fallthru
      _
    %s52 = sadd.s32 0, 0
    %p53 = scmp.lt.s32.totalorder %s52, 0
    %s54 = scalar_select %p53, %s52, 0
    %s55 = smul.u32 2, %s54
    %s56 = sadd.s32 0, 0
    %p57 = scmp.lt.s32.totalorder %s56, 0
    %s58 = scalar_select %p57, %s56, 0
    %s59 = smul.u32 2, %s58
    %s60 = sadd.s32 0, 0
    %s61 = smul.u32 %s60, 16
    %s62 = ssub.s32 16, %s61
    %p63 = scmp.eq.s32.totalorder 0, 0
    // Predicated region
    $region18: #{tpu_custom_call.1} parent=1 // pred_check
      %p64 = pneg %p63
    $region19: #{tpu_custom_call.1} parent=1 // pred_check_branch
      %66 = sbr.rel (%p64) target = $region21
    $region20: #{tpu_custom_call.1} parent=1 // pred_region
      %67 = vst [vmem:[#allocation7] sm:$0xff] 0.0
      %68 = vst [vmem:[#allocation7 + $0x8] sm:$0xff] 0.0
      %69 = vst [vmem:[#allocation7 + $0x10] sm:$0xff] 0.0
    $region21: #{tpu_custom_call.1} parent=1 // pred_fallthru
      _
    %p70 = scmp.ge.s32.totalorder %s62, 16
    // Predicated region
    $region22: #{tpu_custom_call.1} parent=1 // pred_check
      %p71 = pneg %p70
    $region23: #{tpu_custom_call.1} parent=1 // pred_check_branch
      %73 = sbr.rel (%p71) target = $region25
    $region24: #{tpu_custom_call.1} parent=1 // pred_region
      %v74 = vld [vmem:[#allocation2] sm:$0xff]
      %v75 = vld [vmem:[#allocation2 + $0x8] sm:$0xff]
      %v76 = vld [vmem:[#allocation5] sm:$0xff]
      %v77 = vld [vmem:[#allocation5 + $0x8] sm:$0xff]
      %v78 = vsub.f32 %v74, %v76
      %v79 = vsub.f32 %v75, %v77
      %v80 = vand.u32 2147483647, %v78
      %v81 = vand.u32 2147483647, %v79
      %v82 = vmul.f32 %v78, %v78
      %v83 = vmul.f32 %v79, %v79
      %vm84 = vcmp.lt.f32.partialorder %v80, 1.0
      %vm85 = vcmp.lt.f32.partialorder %v81, 1.0
      %v86 = vmul.f32 %v82, 0.5
      %v87 = vmul.f32 %v83, 0.5
      %v88 = vsub.f32 %v80, 0.5
      %v89 = vsub.f32 %v81, 0.5
      %v90 = vsel %vm84, %v86, %v88
      %v91 = vsel %vm85, %v87, %v89
      %v92 = vld [vmem:[#allocation7] sm:$0xff]
      %v93 = vadd.f32 %v82, %v83
      %v94 = vadd.f32 %v92, %v93
      %95 = vst [vmem:[#allocation7] sm:$0xff] %v94
      %s96 = scalar_lea.vmem [#allocation7], 8
      %v97 = vld [vmem:[%s96] sm:$0xff]
      %v98 = vadd.f32 %v80, %v81
      %v99 = vadd.f32 %v97, %v98
      %100 = vst [vmem:[%s96] sm:$0xff] %v99
      %s101 = scalar_lea.vmem [#allocation7], 16
      %v102 = vld [vmem:[%s101] sm:$0xff]
      %v103 = vadd.f32 %v90, %v91
      %v104 = vadd.f32 %v102, %v103
      %105 = vst [vmem:[%s101] sm:$0xff] %v104
    $region25: #{tpu_custom_call.1} parent=1 // pred_fallthru
      _
    %p106 = scmp.lt.s32.totalorder %s62, 16
    // Predicated region
    $region26: #{tpu_custom_call.1} parent=1 // pred_check
      %p107 = pneg %p106
    $region27: #{tpu_custom_call.1} parent=1 // pred_check_branch
      %109 = sbr.rel (%p107) target = $region29
    $region28: #{tpu_custom_call.1} parent=1 // pred_region
      %v110 = vlaneseq
      %v111 = vshrl.u32 %v110, 7
      %v112 = vadd.s32 %v111, 8
      %v113 = vld [vmem:[#allocation2] sm:$0xff]
      %v114 = vld [vmem:[#allocation2 + $0x8] sm:$0xff]
      %v115 = vld [vmem:[#allocation5] sm:$0xff]
      %v116 = vld [vmem:[#allocation5 + $0x8] sm:$0xff]
      %v117 = vsub.f32 %v113, %v115
      %v118 = vsub.f32 %v114, %v116
      %s119 = ssub.s32 %s62, 0
      %v120 = vstv %s119
      %vm121 = vcmp.lt.s32.totalorder %v111, %v120
      %vm122 = vcmp.lt.s32.totalorder %v112, %v120
      %v123 = vsel %vm121, %v117, 0.0
      %v124 = vsel %vm122, %v118, 0.0
      %v125 = vand.u32 2147483647, %v123
      %v126 = vand.u32 2147483647, %v124
      %v127 = vmul.f32 %v123, %v123
      %v128 = vmul.f32 %v124, %v124
      %vm129 = vcmp.lt.f32.partialorder %v125, 1.0
      %vm130 = vcmp.lt.f32.partialorder %v126, 1.0
      %v131 = vmul.f32 %v127, 0.5
      %v132 = vmul.f32 %v128, 0.5
      %v133 = vsub.f32 %v125, 0.5
      %v134 = vsub.f32 %v126, 0.5
      %v135 = vsel %vm129, %v131, %v133
      %v136 = vsel %vm130, %v132, %v134
      %v137 = vld [vmem:[#allocation7] sm:$0xff]
      %v138 = vadd.f32 %v127, %v128
      %v139 = vadd.f32 %v137, %v138
      %140 = vst [vmem:[#allocation7] sm:$0xff] %v139
      %s141 = scalar_lea.vmem [#allocation7], 8
      %v142 = vld [vmem:[%s141] sm:$0xff]
      %v143 = vadd.f32 %v125, %v126
      %v144 = vadd.f32 %v142, %v143
      %145 = vst [vmem:[%s141] sm:$0xff] %v144
      %s146 = scalar_lea.vmem [#allocation7], 16
      %v147 = vld [vmem:[%s146] sm:$0xff]
      %v148 = vadd.f32 %v135, %v136
      %v149 = vadd.f32 %v147, %v148
      %150 = vst [vmem:[%s146] sm:$0xff] %v149
    $region29: #{tpu_custom_call.1} parent=1 // pred_fallthru
      _
    // Predicated region
    $region30: #{tpu_custom_call.1} parent=1 // pred_check
      _
    $region31: #{tpu_custom_call.1} parent=1 // pred_check_branch
      %152 = sbr.rel (0) target = $region33
    $region32: #{tpu_custom_call.1} parent=1 // pred_region
      %s154 = ssub.s32 384, 384
      %155 = vsyncadd [#allocation4], %s154
      %s156 = sshll.u32 [#allocation7], 4
      %s157 = int_to_ptr.vmem [resolvable:$true] %s156
      %162 = dma.vmem_to_hbm [thread:$0]  %s157, 384, %s2, [#allocation4], 128, 128, 8
    $region33: #{tpu_custom_call.1} parent=1 // pred_fallthru
      _
    // Predicated region
    $region34: #{tpu_custom_call.1} parent=1 // pred_check
      _
    $region35: #{tpu_custom_call.1} parent=1 // pred_check_branch
      %164 = sbr.rel (0) target = $region37
    $region36: #{tpu_custom_call.1} parent=1 // pred_region
      %165 = dma.done [#allocation4], 384
    $region37: #{tpu_custom_call.1} parent=1 // pred_fallthru
      _
    %166 = vsyncpa [#allocation3], 1
    %167 = vsyncpa [#allocation6], 1
    %168 = vsyncpa [#allocation4], 1

</llo_original>
